<compile_context>
chip_gen: v6e
topology: v6e:2x2x1
jax: 0.10.0
libtpu: 0.0.40
codegen_flags: <defaults>
</compile_context>

<pallas_src>
import jax
import jax.numpy as jnp
from jax.experimental import pallas as pl
from jax.experimental.pallas import tpu as pltpu

BALANCE_COF = 4
CLAMP_MIN = 1.4013e-45        # PyTorch's constant (f32 subnormal)
_TPU_CLAMP_MIN = 1.1754944e-38  # smallest f32 normal: TPU flushes subnormals to 0,
                                # so clamp here to avoid log(0) at pred == 0.


def _round_up(x, m):
    return ((x + m - 1) // m) * m


def _default_max_tile_s():
    """Pick the per-step spatial tile (sublane) size by TPU generation."""
    try:
        kind = jax.devices()[0].device_kind.lower()
    except Exception:  # pragma: no cover - CPU / interpret fallback
        return 512
    if "v6" in kind or "v7" in kind:
        # overhead-bound regime on v6e/v7x: bigger steps amortize the ~0.35 us
        # fixed per-grid-step cost.
        return 1024
    return 512


def _focal_kernel(pred_ref, gt_ref, out_ref, acc_ref):
    # Block shapes: pred/gt (1, 3, tile_s, 128); out (1, 3, 8, 128);
    # acc scratch (3, 8, 128) f32, persistent across the reduction axis.
    t = pl.program_id(2)

    @pl.when(t == 0)
    def _init():
        acc_ref[...] = jnp.zeros_like(acc_ref)

    pred = jnp.clip(pred_ref[0].astype(jnp.float32), _TPU_CLAMP_MIN, 1.0)  # (3,ts,128)
    gt = gt_ref[0].astype(jnp.float32)                                     # (3,ts,128)

    fos = jnp.sum(gt, axis=0, keepdims=True)   # per-voxel channel sum, (1, ts, 128)
    is_pos = gt == 1.0

    # pos (gt==1) and neg (gt<1) branches are disjoint -> one log per element (EUP).
    log_term = jnp.log(jnp.where(is_pos, pred, 1.0 - pred))

    # neg weight: (1-gt)^4, with the balance factor folded in via a single select:
    # gt==0 voxels whose voxel has positive mass get weight BALANCE_COF (since
    # (1-0)^4 == 1 the multiply collapses to the constant).
    neg_w = jnp.square(jnp.square(1.0 - gt))
    neg_w = jnp.where((gt == 0.0) & (fos > 0.0), jnp.float32(BALANCE_COF), neg_w)

    pos_factor = jnp.square(1.0 - pred)          # BALANCE_COF applied in the epilogue
    neg_factor = jnp.square(pred) * neg_w
    fused = log_term * jnp.where(is_pos, pos_factor, neg_factor)

    zeros = jnp.zeros_like(fused)
    pos_loss = jnp.where(is_pos, fused, zeros)
    neg_loss = jnp.where(is_pos, zeros, fused)
    pos_cnt = is_pos.astype(jnp.float32)

    def _fold8(x):  # (3, tile_s, 128) -> (8, 128): regroup onto vreg tiles, pure VPU adds
        return jnp.sum(x.reshape(-1, 8, 128), axis=0)

    acc_ref[0] += _fold8(pos_loss)
    acc_ref[1] += _fold8(neg_loss)
    acc_ref[2] += _fold8(pos_cnt)

    @pl.when(t == pl.num_programs(2) - 1)
    def _finalize():
        out_ref[0] = acc_ref[...]


def focal_loss(pred, gt, *, max_tile_s=None):
    """pred, gt: (B, 3, D, H, W) float32 or bfloat16.

    Returns the scalar loss (float32), matching the PyTorch FocalLoss forward.
    """
    B, C = int(pred.shape[0]), int(pred.shape[1])
    assert C == 3, "reference code hard-codes channel expansion to 3"
    S = 1
    for d in pred.shape[2:]:
        S *= int(d)

    if max_tile_s is None:
        max_tile_s = _default_max_tile_s()
    max_tile_s = max(16, _round_up(int(max_tile_s), 16))

    # ---- tiling: lane-dense (…, tile_s, 128) blocks, padded spatial axis ----
    nb_raw = pl.cdiv(S, 128)                       # 128-lane rows needed
    n_chunks = 2 if nb_raw >= 32 else 1            # split reduction for 2-TC chips
    per_chunk = pl.cdiv(nb_raw, n_chunks)
    t_inner = max(1, pl.cdiv(per_chunk, max_tile_s))
    tile_s = _round_up(pl.cdiv(per_chunk, t_inner), 16)   # mult of 16 (bf16-safe)
    padded_nb = tile_s * t_inner * n_chunks
    padded_S = padded_nb * 128

    p = pred.reshape(B, C, S)
    g = gt.reshape(B, C, S)
    if padded_S != S:
        # pred=0, gt=0 padding contributes exactly 0 to pos/neg/num_pos sums.
        pad = ((0, 0), (0, 0), (0, padded_S - S))
        p = jnp.pad(p, pad)
        g = jnp.pad(g, pad)
    p = p.reshape(B, C, padded_nb, 128)
    g = g.reshape(B, C, padded_nb, 128)

    vmem_limit = (48 if tile_s > 512 else 32) * 1024 * 1024

    elems = B * C * padded_S
    cost = pl.CostEstimate(
        flops=22 * elems,
        transcendentals=elems,
        bytes_accessed=2 * elems * p.dtype.itemsize + B * n_chunks * 3 * 8 * 128 * 4,
    )

    partial = pl.pallas_call(
        _focal_kernel,
        out_shape=jax.ShapeDtypeStruct((B * n_chunks, 3, 8, 128), jnp.float32),
        grid_spec=pltpu.PrefetchScalarGridSpec(
            num_scalar_prefetch=0,
            grid=(B, n_chunks, t_inner),
            in_specs=[
                pl.BlockSpec((1, C, tile_s, 128),
                             lambda b, c, t: (b, 0, c * t_inner + t, 0)),
                pl.BlockSpec((1, C, tile_s, 128),
                             lambda b, c, t: (b, 0, c * t_inner + t, 0)),
            ],
            out_specs=pl.BlockSpec((1, 3, 8, 128),
                                   lambda b, c, t: (b * n_chunks + c, 0, 0, 0)),
            scratch_shapes=[pltpu.VMEM((3, 8, 128), jnp.float32)],
        ),
        compiler_params=pltpu.CompilerParams(
            dimension_semantics=("parallel", "parallel", "arbitrary"),
            vmem_limit_bytes=vmem_limit,
        ),
        cost_estimate=cost,
    )(p, g)

    sums = jnp.sum(partial, axis=(0, 2, 3))        # (3,) = pos_sum, neg_sum, num_pos
    pos_sum = sums[0] * BALANCE_COF                # BALANCE_COF hoisted out of the kernel
    neg_sum = sums[1]
    num_pos = sums[2]
    safe_np = jnp.where(num_pos == 0, 1.0, num_pos)
    return jnp.where(num_pos == 0, -neg_sum, -(pos_sum + neg_sum) / safe_np)


def _ref_loss(pred, gt):
    """Pure-JAX port of the PyTorch _neg_loss for verification."""
    pred = jnp.clip(pred.astype(jnp.float32), CLAMP_MIN, 1.0)
    gt = gt.astype(jnp.float32)
    fos = jnp.sum(gt, axis=1)
    pos_inds = (gt == 1).astype(jnp.float32)
    neg_inds = (gt < 1).astype(jnp.float32)
    fos_inds = (fos > 0).astype(jnp.float32)[:, None]   # broadcast over C=3
    neg_inds = neg_inds + (BALANCE_COF - 1) * fos_inds * (gt == 0).astype(jnp.float32)
    neg_weights = (1.0 - gt) ** 4
    pos_loss = jnp.log(pred) * (1.0 - pred) ** 2 * pos_inds * BALANCE_COF
    neg_loss = jnp.log(1.0 - pred) * pred ** 2 * neg_weights * neg_inds
    num_pos = pos_inds.sum()
    pos_loss = pos_loss.sum()
    neg_loss = neg_loss.sum()
    safe_np = jnp.where(num_pos == 0, 1.0, num_pos)
    return jnp.where(num_pos == 0, -neg_loss, -(pos_loss + neg_loss) / safe_np)


def _make_inputs(key, shape):
    kp, kg, km, kk = jax.random.split(key, 4)
    # predictions strictly inside (0, 1), like a sigmoid heatmap
    pred = jax.random.uniform(kp, shape, jnp.float32, 0.01, 0.99)
    # heatmap-like ground truth: mostly exact zeros, some soft values, a few exact ones
    gt = jax.random.uniform(kg, shape, jnp.float32, 0.0, 0.95)
    soft_mask = jax.random.uniform(km, shape) < 0.10
    gt = jnp.where(soft_mask, gt, 0.0)
    peak_mask = jax.random.uniform(kk, shape) < 0.02
    gt = jnp.where(peak_mask, 1.0, gt)
    return pred, gt


if __name__ == "__main__":
    key = jax.random.PRNGKey(0)
    k1, k2, k3 = jax.random.split(key, 3)

    cases = [
        # (shape, kwargs)  -- all small; exercise exact-fit, padding, and chunk-split paths
        ((2, 3, 8, 16, 16), {}),                     # S=2048, no padding
        ((1, 3, 3, 10, 13), {}),                     # S=390, padding path
        ((1, 3, 32, 16, 16), {"max_tile_s": 16}),    # 2 chunks x 2 reduction steps
    ]
    keys = [k1, k2, k3]

    for (shape, kwargs), k in zip(cases, keys):
        pred, gt = _make_inputs(k, shape)
        loss = focal_loss(pred, gt, **kwargs)
        jax.block_until_ready(loss)
        ref = _ref_loss(pred, gt)
        assert jnp.allclose(loss, ref, rtol=1e-4, atol=1e-4), (shape, loss, ref)

    print("KERNEL_OK")
</pallas_src>

<mosaic_0001>
module attributes {stable_mosaic.version = 11 : i64} {
  func.func @_focal_kernel(%arg0: i32, %arg1: i32, %arg2: i32, %arg3: memref<1x3x16x128xf32, #tpu.memory_space<vmem>>, %arg4: memref<1x3x16x128xf32, #tpu.memory_space<vmem>>, %arg5: memref<1x3x8x128xf32, #tpu.memory_space<vmem>>, %arg6: memref<3x8x128xf32, #tpu.memory_space<vmem>>) attributes {dimension_semantics = [#tpu.dimension_semantics<parallel>, #tpu.dimension_semantics<parallel>, #tpu.dimension_semantics<arbitrary>], iteration_bounds = array<i64: 2, 1, 1>, scalar_prefetch = 0 : i64, scratch_operands = 1 : i64, tpu.core_type = #tpu.core_type<tc>, window_params = [{transform_indices = @transform_0, window_bounds = array<i64: 1, 3, 16, 128>}, {transform_indices = @transform_1, window_bounds = array<i64: 1, 3, 16, 128>}, {transform_indices = @transform_2, window_bounds = array<i64: 1, 3, 8, 128>}]} {
    %c0_i32 = arith.constant 0 : i32
    %0 = arith.cmpi eq, %arg2, %c0_i32 : i32
    %1 = arith.extui %0 : i1 to i32
    %c0_i32_0 = arith.constant 0 : i32
    %2 = arith.cmpi ne, %1, %c0_i32_0 : i32
    scf.if %2 {
      %cst_39 = arith.constant 0.000000e+00 : f32
      %70 = vector.broadcast %cst_39 : f32 to vector<3x8x128xf32>
      %c0_40 = arith.constant 0 : index
      %c0_41 = arith.constant 0 : index
      %c0_42 = arith.constant 0 : index
      %71 = vector.load %arg6[%c0_40, %c0_41, %c0_42] : memref<3x8x128xf32, #tpu.memory_space<vmem>>, vector<3x8x128xf32>
      tpu.vector_store %arg6[%c0_40, %c0_41, %c0_42], %70 {strides = array<i32>} : memref<3x8x128xf32, #tpu.memory_space<vmem>>, vector<3x8x128xf32>,
    } else {
    }
    %c0 = arith.constant 0 : index
    %c0_1 = arith.constant 0 : index
    %c0_2 = arith.constant 0 : index
    %c0_3 = arith.constant 0 : index
    %3 = vector.load %arg3[%c0, %c0_1, %c0_2, %c0_3] : memref<1x3x16x128xf32, #tpu.memory_space<vmem>>, vector<1x3x16x128xf32>
    %4 = vector.shape_cast %3 : vector<1x3x16x128xf32> to vector<3x16x128xf32>
    %cst = arith.constant 1.17549435E-38 : f32
    %cst_4 = arith.constant 1.000000e+00 : f32
    %5 = vector.broadcast %cst : f32 to vector<3x16x128xf32>
    %6 = arith.maximumf %5, %4 : vector<3x16x128xf32>
    %7 = vector.broadcast %cst_4 : f32 to vector<3x16x128xf32>
    %8 = arith.minimumf %7, %6 : vector<3x16x128xf32>
    %c0_5 = arith.constant 0 : index
    %c0_6 = arith.constant 0 : index
    %c0_7 = arith.constant 0 : index
    %c0_8 = arith.constant 0 : index
    %9 = vector.load %arg4[%c0_5, %c0_6, %c0_7, %c0_8] : memref<1x3x16x128xf32, #tpu.memory_space<vmem>>, vector<1x3x16x128xf32>
    %10 = vector.shape_cast %9 : vector<1x3x16x128xf32> to vector<3x16x128xf32>
    %cst_9 = arith.constant dense<0.000000e+00> : vector<16x128xf32>
    %11 = vector.multi_reduction <add>, %10, %cst_9 [0] : vector<3x16x128xf32> to vector<16x128xf32>
    %12 = vector.shape_cast %11 : vector<16x128xf32> to vector<1x16x128xf32>
    %cst_10 = arith.constant 1.000000e+00 : f32
    %13 = vector.broadcast %cst_10 : f32 to vector<3x16x128xf32>
    %14 = arith.cmpf oeq, %10, %13 : vector<3x16x128xf32>
    %cst_11 = arith.constant 1.000000e+00 : f32
    %15 = vector.broadcast %cst_11 : f32 to vector<3x16x128xf32>
    %16 = arith.subf %15, %8 : vector<3x16x128xf32>
    %17 = arith.select %14, %8, %16 : vector<3x16x128xi1>, vector<3x16x128xf32>
    %18 = math.log %17 : vector<3x16x128xf32>
    %cst_12 = arith.constant 1.000000e+00 : f32
    %19 = vector.broadcast %cst_12 : f32 to vector<3x16x128xf32>
    %20 = arith.subf %19, %10 : vector<3x16x128xf32>
    %21 = arith.mulf %20, %20 : vector<3x16x128xf32>
    %22 = arith.mulf %21, %21 : vector<3x16x128xf32>
    %cst_13 = arith.constant 0.000000e+00 : f32
    %23 = vector.broadcast %cst_13 : f32 to vector<3x16x128xf32>
    %24 = arith.cmpf oeq, %10, %23 : vector<3x16x128xf32>
    %cst_14 = arith.constant 0.000000e+00 : f32
    %25 = vector.broadcast %cst_14 : f32 to vector<1x16x128xf32>
    %26 = arith.cmpf ogt, %12, %25 : vector<1x16x128xf32>
    %27 = vector.broadcast %26 : vector<1x16x128xi1> to vector<3x16x128xi1>
    %28 = arith.andi %24, %27 : vector<3x16x128xi1>
    %cst_15 = arith.constant 4.000000e+00 : f32
    %29 = vector.broadcast %cst_15 : f32 to vector<3x16x128xf32>
    %30 = arith.select %28, %29, %22 : vector<3x16x128xi1>, vector<3x16x128xf32>
    %cst_16 = arith.constant 1.000000e+00 : f32
    %31 = vector.broadcast %cst_16 : f32 to vector<3x16x128xf32>
    %32 = arith.subf %31, %8 : vector<3x16x128xf32>
    %33 = arith.mulf %32, %32 : vector<3x16x128xf32>
    %34 = arith.mulf %8, %8 : vector<3x16x128xf32>
    %35 = arith.mulf %34, %30 : vector<3x16x128xf32>
    %36 = arith.select %14, %33, %35 : vector<3x16x128xi1>, vector<3x16x128xf32>
    %37 = arith.mulf %18, %36 : vector<3x16x128xf32>
    %cst_17 = arith.constant 0.000000e+00 : f32
    %38 = vector.broadcast %cst_17 : f32 to vector<3x16x128xf32>
    %39 = arith.select %14, %37, %38 : vector<3x16x128xi1>, vector<3x16x128xf32>
    %40 = arith.select %14, %38, %37 : vector<3x16x128xi1>, vector<3x16x128xf32>
    %41 = arith.extui %14 : vector<3x16x128xi1> to vector<3x16x128xi32>
    %42 = arith.sitofp %41 : vector<3x16x128xi32> to vector<3x16x128xf32>
    %c0_18 = arith.constant 0 : index
    %c0_19 = arith.constant 0 : index
    %c0_20 = arith.constant 0 : index
    %43 = vector.load %arg6[%c0_18, %c0_19, %c0_20] : memref<3x8x128xf32, #tpu.memory_space<vmem>>, vector<1x8x128xf32>
    %44 = vector.shape_cast %43 : vector<1x8x128xf32> to vector<8x128xf32>
    %45 = vector.shape_cast %39 : vector<3x16x128xf32> to vector<6x8x128xf32>
    %cst_21 = arith.constant dense<0.000000e+00> : vector<8x128xf32>
    %46 = vector.multi_reduction <add>, %45, %cst_21 [0] : vector<6x8x128xf32> to vector<8x128xf32>
    %47 = arith.addf %44, %46 : vector<8x128xf32>
    %c0_22 = arith.constant 0 : index
    %c0_23 = arith.constant 0 : index
    %c0_24 = arith.constant 0 : index
    %48 = vector.load %arg6[%c0_22, %c0_23, %c0_24] : memref<3x8x128xf32, #tpu.memory_space<vmem>>, vector<1x8x128xf32>
    %49 = vector.shape_cast %48 : vector<1x8x128xf32> to vector<8x128xf32>
    %50 = vector.shape_cast %47 : vector<8x128xf32> to vector<1x8x128xf32>
    tpu.vector_store %arg6[%c0_22, %c0_23, %c0_24], %50 {strides = array<i32>} : memref<3x8x128xf32, #tpu.memory_space<vmem>>, vector<1x8x128xf32>,
    %c1 = arith.constant 1 : index
    %c0_25 = arith.constant 0 : index
    %c0_26 = arith.constant 0 : index
    %51 = vector.load %arg6[%c1, %c0_25, %c0_26] : memref<3x8x128xf32, #tpu.memory_space<vmem>>, vector<1x8x128xf32>
    %52 = vector.shape_cast %51 : vector<1x8x128xf32> to vector<8x128xf32>
    %53 = vector.shape_cast %40 : vector<3x16x128xf32> to vector<6x8x128xf32>
    %cst_27 = arith.constant dense<0.000000e+00> : vector<8x128xf32>
    %54 = vector.multi_reduction <add>, %53, %cst_27 [0] : vector<6x8x128xf32> to vector<8x128xf32>
    %55 = arith.addf %52, %54 : vector<8x128xf32>
    %c1_28 = arith.constant 1 : index
    %c0_29 = arith.constant 0 : index
    %c0_30 = arith.constant 0 : index
    %56 = vector.load %arg6[%c1_28, %c0_29, %c0_30] : memref<3x8x128xf32, #tpu.memory_space<vmem>>, vector<1x8x128xf32>
    %57 = vector.shape_cast %56 : vector<1x8x128xf32> to vector<8x128xf32>
    %58 = vector.shape_cast %55 : vector<8x128xf32> to vector<1x8x128xf32>
    tpu.vector_store %arg6[%c1_28, %c0_29, %c0_30], %58 {strides = array<i32>} : memref<3x8x128xf32, #tpu.memory_space<vmem>>, vector<1x8x128xf32>,
    %c2 = arith.constant 2 : index
    %c0_31 = arith.constant 0 : index
    %c0_32 = arith.constant 0 : index
    %59 = vector.load %arg6[%c2, %c0_31, %c0_32] : memref<3x8x128xf32, #tpu.memory_space<vmem>>, vector<1x8x128xf32>
    %60 = vector.shape_cast %59 : vector<1x8x128xf32> to vector<8x128xf32>
    %61 = vector.shape_cast %42 : vector<3x16x128xf32> to vector<6x8x128xf32>
    %cst_33 = arith.constant dense<0.000000e+00> : vector<8x128xf32>
    %62 = vector.multi_reduction <add>, %61, %cst_33 [0] : vector<6x8x128xf32> to vector<8x128xf32>
    %63 = arith.addf %60, %62 : vector<8x128xf32>
    %c2_34 = arith.constant 2 : index
    %c0_35 = arith.constant 0 : index
    %c0_36 = arith.constant 0 : index
    %64 = vector.load %arg6[%c2_34, %c0_35, %c0_36] : memref<3x8x128xf32, #tpu.memory_space<vmem>>, vector<1x8x128xf32>
    %65 = vector.shape_cast %64 : vector<1x8x128xf32> to vector<8x128xf32>
    %66 = vector.shape_cast %63 : vector<8x128xf32> to vector<1x8x128xf32>
    tpu.vector_store %arg6[%c2_34, %c0_35, %c0_36], %66 {strides = array<i32>} : memref<3x8x128xf32, #tpu.memory_space<vmem>>, vector<1x8x128xf32>,
    %c0_i32_37 = arith.constant 0 : i32
    %67 = arith.cmpi eq, %arg2, %c0_i32_37 : i32
    %68 = arith.extui %67 : i1 to i32
    %c0_i32_38 = arith.constant 0 : i32
    %69 = arith.cmpi ne, %68, %c0_i32_38 : i32
    scf.if %69 {
      %c0_39 = arith.constant 0 : index
      %c0_40 = arith.constant 0 : index
      %c0_41 = arith.constant 0 : index
      %70 = vector.load %arg6[%c0_39, %c0_40, %c0_41] : memref<3x8x128xf32, #tpu.memory_space<vmem>>, vector<3x8x128xf32>
      %c0_42 = arith.constant 0 : index
      %c0_43 = arith.constant 0 : index
      %c0_44 = arith.constant 0 : index
      %c0_45 = arith.constant 0 : index
      %71 = vector.load %arg5[%c0_42, %c0_43, %c0_44, %c0_45] : memref<1x3x8x128xf32, #tpu.memory_space<vmem>>, vector<1x3x8x128xf32>
      %72 = vector.shape_cast %71 : vector<1x3x8x128xf32> to vector<3x8x128xf32>
      %73 = vector.shape_cast %70 : vector<3x8x128xf32> to vector<1x3x8x128xf32>
      tpu.vector_store %arg5[%c0_42, %c0_43, %c0_44, %c0_45], %73 {strides = array<i32>} : memref<1x3x8x128xf32, #tpu.memory_space<vmem>>, vector<1x3x8x128xf32>,
    } else {
    }
    return
  }
  func.func @transform_0(%arg0: i32, %arg1: i32, %arg2: i32) -> (i32, i32, i32, i32) {
    %c1_i32 = arith.constant 1 : i32
    %0 = arith.muli %arg1, %c1_i32 : i32
    %1 = arith.addi %0, %arg2 : i32
    %c0_i32 = arith.constant 0 : i32
    %c0_i32_0 = arith.constant 0 : i32
    %c0_i32_1 = arith.constant 0 : i32
    return %arg0, %c0_i32, %1, %c0_i32_0 : i32, i32, i32, i32
  }
  func.func @transform_1(%arg0: i32, %arg1: i32, %arg2: i32) -> (i32, i32, i32, i32) {
    %c1_i32 = arith.constant 1 : i32
    %0 = arith.muli %arg1, %c1_i32 : i32
    %1 = arith.addi %0, %arg2 : i32
    %c0_i32 = arith.constant 0 : i32
    %c0_i32_0 = arith.constant 0 : i32
    %c0_i32_1 = arith.constant 0 : i32
    return %arg0, %c0_i32, %1, %c0_i32_0 : i32, i32, i32, i32
  }
  func.func @transform_2(%arg0: i32, %arg1: i32, %arg2: i32) -> (i32, i32, i32, i32) {
    %c1_i32 = arith.constant 1 : i32
    %0 = arith.muli %arg0, %c1_i32 : i32
    %1 = arith.addi %0, %arg1 : i32
    %c0_i32 = arith.constant 0 : i32
    %c0_i32_0 = arith.constant 0 : i32
    %c0_i32_1 = arith.constant 0 : i32
    %c0_i32_2 = arith.constant 0 : i32
    return %1, %c0_i32, %c0_i32_0, %c0_i32_1 : i32, i32, i32, i32
  }
}

</mosaic_0001>

<llo_original>
// kernel: tpu_custom_call.1
$region0: #{tpu_custom_call.1}
  #allocation0 [shape = 'u32[]', space=smem, size = 0x4, offset = 0x4, fixed_abs, tag = 'smem constant byte address 0x4 - core index']
  #allocation1 [shape = 'u32[144,128]{1,0:T(1,128)}', space=vmem, size = 0x12000, scoped, tag = 'internal scratch']
  #allocation2 [shape = 'f32[3,8,128]{2,1,0:T(8,128)}', space=vmem, size = 0x3000, scoped, tag = 'scratch operand']
  %s0 = inlined_call_operand.hbm [shape: f32[2,3,16,128], index: 0, kind: input, shape index: {}]
  %s1 = inlined_call_operand.hbm [shape: f32[2,3,16,128], index: 1, kind: input, shape index: {}]
  %s2 = inlined_call_operand.hbm [shape: f32[2,3,8,128], index: 2, kind: output, shape index: {}]
  %s3 = sld [smem:[#allocation0]]
  $region57: #{tpu_custom_call.1} parent=0
    _
  %s5 = ssub.s32 1, %s3
  %s6 = scalar_select 0, %s5, %s3
  $region1: #{tpu_custom_call.1} parent=0
    #allocation3 [shape = 'u8[49152]{0}', space=vmem, size = 0xc000, scoped, tag = 'input window, operand 0']
    #allocation4 [shape = 's32[2]{0}', space=sflag, size = 0x8, scoped, tag = 'scoped memory for tpu_custom_call.1']
    #allocation5 [shape = 's32[2]{0}', space=sflag, size = 0x8, scoped, tag = 'scoped memory for tpu_custom_call.1']
    #allocation6 [shape = 'u8[49152]{0}', space=vmem, size = 0xc000, scoped, tag = 'input window, operand 1']
    #allocation7 [shape = 's32[2]{0}', space=sflag, size = 0x8, scoped, tag = 'scoped memory for tpu_custom_call.1']
    #allocation8 [shape = 'u8[24576]{0}', space=vmem, size = 0x6000, scoped, tag = 'output window, operand 0']
    %7 = vsyncpa [#allocation4], 0
    %s8 = scalar_lea.sflag [#allocation4], 1
    %9 = vsyncpa %s8, 0
    %10 = vsyncpa [#allocation7], 0
    %s11 = scalar_lea.sflag [#allocation7], 1
    %12 = vsyncpa %s11, 0
    %13 = vsyncpa [#allocation5], 0
    %s14 = scalar_lea.sflag [#allocation5], 1
    %15 = vsyncpa %s14, 0
    loop: start=0, step=1, limit=4
    $region2: #{tpu_custom_call.1} parent=1 // loop_pre_header
      _
    $region3: #{tpu_custom_call.1} parent=1 // loop_header
      %s17 = sphi 0, %s21
      %p18 = scmp.ge.s32.totalorder %s17, 4
      %s24 = sphi 0, %s43
      %s25 = sphi 0, %s39
      %s26 = sphi 0, %s35
      %s27 = sphi 0, %s24
      %s28 = sphi 0, %s25
      %s29 = sphi 0, %s26
      %s30 = sphi 0, %s27
      %s31 = sphi 0, %s28
      %s32 = sphi 0, %s29
      %s50 = sphi 0, %s52
      %s53 = sphi 0, %s50
      %s54 = sphi 0, %s53
      %s70 = sphi 0, %s54
      %s80 = sphi 0, %s82
      %s83 = sphi 0, %s80
      %s84 = sphi 0, %s83
      %s100 = sphi 0, %s84
      %s108 = sphi 0, %s110
      %s111 = sphi 0, %s108
      %s112 = sphi 0, %s111
      %s128 = sphi 0, %s112
    $region4: #{tpu_custom_call.1} parent=1 // loop_header_branch
      %20 = sbr.rel (%p18) target = $region8
    $region5: #{tpu_custom_call.1} parent=1 // loop_body
      %s22 = ssub.s32 %s17, 1
      %s23 = ssub.s32 %s17, 2
      %s33 = sadd.s32 1, %s26
      %p34 = scmp.ge.s32.totalorder %s33, 1
      %s35 = scalar_select %p34, 0, %s33
      %s36 = sadd.s32 1, %s25
      %s37 = scalar_select %p34, %s36, %s25
      %p38 = scmp.ge.s32.totalorder %s37, 1
      %s39 = scalar_select %p38, 0, %s37
      %s40 = sadd.s32 1, %s24
      %s41 = scalar_select %p38, %s40, %s24
      %p42 = scmp.ge.s32.totalorder %s41, 2
      %s43 = scalar_select %p42, 0, %s41
      %s44 = sadd.s32 %s25, %s26
      %s45 = sadd.s32 %s39, %s35
      %s46 = ssub.s32 %s24, %s43
      %s47 = ssub.s32 %s44, %s45
      %s48 = sor.u32 %s46, %s47
      %p49 = scmp.eq.s32.totalorder %s48, 0
      %s51 = sadd.s32 %s50, 1
      %s52 = scalar_select %p49, %s50, %s51
      %p55 = pneg %p49
      %p56 = scmp.eq.s32.totalorder %s17, 1
      %p57 = por %p55, %p56
      %p58 = scmp.ne.s32.totalorder %s50, %s53
      %p59 = scmp.eq.s32.totalorder %s17, 0
      %p60 = por %p58, %p59
      %p61 = scmp.ne.s32.totalorder %s50, %s53
      %p62 = scmp.eq.s32.totalorder %s22, 1
      %p63 = por %p61, %p62
      %p64 = scmp.ne.s32.totalorder %s53, %s54
      %p65 = scmp.eq.s32.totalorder %s22, 0
      %p66 = por %p64, %p65
      %p67 = scmp.ne.s32.totalorder %s53, %s54
      %p68 = scmp.eq.s32.totalorder %s23, 1
      %p69 = por %p67, %p68
      %p71 = scmp.ne.s32.totalorder %s54, %s70
      %p72 = scmp.eq.s32.totalorder %s23, 0
      %p73 = por %p71, %p72
      %s74 = sadd.s32 %s25, %s26
      %s75 = sadd.s32 %s39, %s35
      %s76 = ssub.s32 %s24, %s43
      %s77 = ssub.s32 %s74, %s75
      %s78 = sor.u32 %s76, %s77
      %p79 = scmp.eq.s32.totalorder %s78, 0
      %s81 = sadd.s32 %s80, 1
      %s82 = scalar_select %p79, %s80, %s81
      %p85 = pneg %p79
      %p86 = scmp.eq.s32.totalorder %s17, 1
      %p87 = por %p85, %p86
      %p88 = scmp.ne.s32.totalorder %s80, %s83
      %p89 = scmp.eq.s32.totalorder %s17, 0
      %p90 = por %p88, %p89
      %p91 = scmp.ne.s32.totalorder %s80, %s83
      %p92 = scmp.eq.s32.totalorder %s22, 1
      %p93 = por %p91, %p92
      %p94 = scmp.ne.s32.totalorder %s83, %s84
      %p95 = scmp.eq.s32.totalorder %s22, 0
      %p96 = por %p94, %p95
      %p97 = scmp.ne.s32.totalorder %s83, %s84
      %p98 = scmp.eq.s32.totalorder %s23, 1
      %p99 = por %p97, %p98
      %p101 = scmp.ne.s32.totalorder %s84, %s100
      %p102 = scmp.eq.s32.totalorder %s23, 0
      %p103 = por %p101, %p102
      %s104 = sadd.s32 %s24, %s25
      %s105 = sadd.s32 %s43, %s39
      %s106 = ssub.s32 %s104, %s105
      %p107 = scmp.eq.s32.totalorder %s106, 0
      %s109 = sadd.s32 %s108, 1
      %s110 = scalar_select %p107, %s108, %s109
      %p113 = pneg %p107
      %p114 = scmp.eq.s32.totalorder %s17, 1
      %p115 = por %p113, %p114
      %p116 = scmp.ne.s32.totalorder %s108, %s111
      %p117 = scmp.eq.s32.totalorder %s17, 0
      %p118 = por %p116, %p117
      %p119 = scmp.ne.s32.totalorder %s108, %s111
      %p120 = scmp.eq.s32.totalorder %s22, 1
      %p121 = por %p119, %p120
      %p122 = scmp.ne.s32.totalorder %s111, %s112
      %p123 = scmp.eq.s32.totalorder %s22, 0
      %p124 = por %p122, %p123
      %p125 = scmp.ne.s32.totalorder %s111, %s112
      %p126 = scmp.eq.s32.totalorder %s23, 1
      %p127 = por %p125, %p126
      %p129 = scmp.ne.s32.totalorder %s112, %s128
      %p130 = scmp.eq.s32.totalorder %s23, 0
      %p131 = por %p129, %p130
      %p132 = scmp.le.s32.totalorder 1, %s17
      %p133 = scmp.lt.s32.totalorder %s17, 3
      %p134 = pnand %p132, %p133
      %p135 = pneg %p134
      // Predicated region
      $region9: #{tpu_custom_call.1} parent=5 // pred_check
        _
      $region10: #{tpu_custom_call.1} parent=5 // pred_check_branch
        %137 = sbr.rel (%p134) target = $region12
      $region11: #{tpu_custom_call.1} parent=5 // pred_region
        %s138 = ssub.s32 %s17, 1
      $region12: #{tpu_custom_call.1} parent=5 // pred_fallthru
        _
      %p139 = scmp.lt.s32.totalorder %s17, 2
      // Predicated region
      $region13: #{tpu_custom_call.1} parent=5 // pred_check
        %p140 = pneg %p139
      $region14: #{tpu_custom_call.1} parent=5 // pred_check_branch
        %142 = sbr.rel (%p140) target = $region16
      $region15: #{tpu_custom_call.1} parent=5 // pred_region
        // Predicated region
        $region17: #{tpu_custom_call.1} parent=15 // pred_check
          %p143 = pneg %p60
        $region18: #{tpu_custom_call.1} parent=15 // pred_check_branch
          %145 = sbr.rel (%p143) target = $region20
        $region19: #{tpu_custom_call.1} parent=15 // pred_region
          %s146 = sand.u32 %s50, 1
          %s147 = scalar_lea.sflag [#allocation4], %s146
          %s148 = sand.u32 %s50, 1
          %s149 = smul.addr %s148, 48
          %s150 = scalar_lea.vmem [#allocation3], %s149
          %s151 = sadd.s32 %s25, %s26
          %s152 = smul.u32 2, %s151
          %s154 = ssub.s32 768, 768
          %155 = vsyncadd %s147, %s154
          %s156 = smul.addr %s24, 6
          %s157 = sadd.s32 %s152, %s156
          %s158 = smul.addr %s157, 128
          %s159 = scalar_lea.hbm %s0, %s158
          %s160 = sshll.u32 %s150, 4
          %s161 = int_to_ptr.vmem [resolvable:$true] %s160
          %166 = dma.hbm_to_vmem [thread:$0]  %s159, 768, %s161, %s147, 128, 128, 8
        $region20: #{tpu_custom_call.1} parent=15 // pred_fallthru
          _
        // Predicated region
        $region21: #{tpu_custom_call.1} parent=15 // pred_check
          %p167 = pneg %p90
        $region22: #{tpu_custom_call.1} parent=15 // pred_check_branch
          %169 = sbr.rel (%p167) target = $region24
        $region23: #{tpu_custom_call.1} parent=15 // pred_region
          %s170 = sand.u32 %s80, 1
          %s171 = scalar_lea.sflag [#allocation7], %s170
          %s172 = sand.u32 %s80, 1
          %s173 = smul.addr %s172, 48
          %s174 = scalar_lea.vmem [#allocation6], %s173
          %s175 = sadd.s32 %s25, %s26
          %s176 = smul.u32 2, %s175
          %s178 = ssub.s32 768, 768
          %179 = vsyncadd %s171, %s178
          %s180 = smul.addr %s24, 6
          %s181 = sadd.s32 %s176, %s180
          %s182 = smul.addr %s181, 128
          %s183 = scalar_lea.hbm %s1, %s182
          %s184 = sshll.u32 %s174, 4
          %s185 = int_to_ptr.vmem [resolvable:$true] %s184
          %190 = dma.hbm_to_vmem [thread:$0]  %s183, 768, %s185, %s171, 128, 128, 8
        $region24: #{tpu_custom_call.1} parent=15 // pred_fallthru
          _
      $region16: #{tpu_custom_call.1} parent=5 // pred_fallthru
        _
      %p191 = scmp.le.s32.totalorder 1, %s17
      %p192 = scmp.lt.s32.totalorder %s17, 3
      %p193 = pnand %p191, %p192
      %p194 = pneg %p193
      // Predicated region
      $region25: #{tpu_custom_call.1} parent=5 // pred_check
        _
      $region26: #{tpu_custom_call.1} parent=5 // pred_check_branch
        %196 = sbr.rel (%p193) target = $region28
      $region27: #{tpu_custom_call.1} parent=5 // pred_region
        %s197 = ssub.s32 %s17, 1
        %s198 = sand.u32 %s53, 1
        %s199 = scalar_lea.sflag [#allocation4], %s198
        %s200 = sand.u32 %s53, 1
        %s201 = smul.addr %s200, 48
        %s202 = scalar_lea.vmem [#allocation3], %s201
        // Predicated region
        $region29: #{tpu_custom_call.1} parent=27 // pred_check
          %p203 = pneg %p66
        $region30: #{tpu_custom_call.1} parent=27 // pred_check_branch
          %205 = sbr.rel (%p203) target = $region32
        $region31: #{tpu_custom_call.1} parent=27 // pred_region
          %206 = dma.done %s199, 768
        $region32: #{tpu_custom_call.1} parent=27 // pred_fallthru
          _
        %s207 = sand.u32 %s83, 1
        %s208 = scalar_lea.sflag [#allocation7], %s207
        %s209 = sand.u32 %s83, 1
        %s210 = smul.addr %s209, 48
        %s211 = scalar_lea.vmem [#allocation6], %s210
        // Predicated region
        $region33: #{tpu_custom_call.1} parent=27 // pred_check
          %p212 = pneg %p96
        $region34: #{tpu_custom_call.1} parent=27 // pred_check_branch
          %214 = sbr.rel (%p212) target = $region36
        $region35: #{tpu_custom_call.1} parent=27 // pred_region
          %215 = dma.done %s208, 768
        $region36: #{tpu_custom_call.1} parent=27 // pred_fallthru
          _
        %s216 = sand.u32 %s53, 1
        %s217 = scalar_lea.sflag [#allocation4], %s216
        %s218 = sand.u32 %s53, 1
        %s219 = smul.addr %s218, 48
        %s220 = scalar_lea.vmem [#allocation3], %s219
        %p221 = pneg %p66
        %p222 = pneg %p63
        %s223 = sand.u32 %s83, 1
        %s224 = scalar_lea.sflag [#allocation7], %s223
        %s225 = sand.u32 %s83, 1
        %s226 = smul.addr %s225, 48
        %s227 = scalar_lea.vmem [#allocation6], %s226
        %p228 = pneg %p96
        %p229 = pneg %p93
        %p230 = pneg %p124
        %p231 = pneg %p121
        %s232 = sand.u32 %s111, 1
        %s233 = scalar_lea.sflag [#allocation5], %s232
        %s234 = sand.u32 %s111, 1
        %s235 = smul.addr %s234, 24
        %s236 = scalar_lea.vmem [#allocation8], %s235
        %s237 = sadd.s32 %s28, %s29
        %s238 = smul.u32 2, %s237
        %s239 = sadd.s32 %s28, %s29
        %s240 = smul.u32 2, %s239
        %s241 = sadd.s32 %s27, %s28
        %p242 = scmp.eq.s32.totalorder %s29, 0
        // Predicated region
        $region37: #{tpu_custom_call.1} parent=27 // pred_check
          %p243 = pneg %p242
        $region38: #{tpu_custom_call.1} parent=27 // pred_check_branch
          %245 = sbr.rel (%p243) target = $region40
        $region39: #{tpu_custom_call.1} parent=27 // pred_region
          %246 = vst [vmem:[#allocation2] sm:$0xff] 0.0
          %247 = vst [vmem:[#allocation2 + $0x8] sm:$0xff] 0.0
          %248 = vst [vmem:[#allocation2 + $0x10] sm:$0xff] 0.0
        $region40: #{tpu_custom_call.1} parent=27 // pred_fallthru
          _
        %v249 = vld [vmem:[%s202] sm:$0xff]
        %v250 = vld [vmem:[%s202 + $0x8] sm:$0xff]
        %v251 = vld [vmem:[%s202 + $0x10] sm:$0xff]
        %v252 = vld [vmem:[%s202 + $0x18] sm:$0xff]
        %v253 = vld [vmem:[%s202 + $0x20] sm:$0xff]
        %v254 = vld [vmem:[%s202 + $0x28] sm:$0xff]
        %v255 = vmax.f32 %v249, 1.1754944e-38
        %v256 = vmax.f32 %v250, 1.1754944e-38
        %v257 = vmax.f32 %v251, 1.1754944e-38
        %v258 = vmax.f32 %v252, 1.1754944e-38
        %v259 = vmax.f32 %v253, 1.1754944e-38
        %v260 = vmax.f32 %v254, 1.1754944e-38
        %v261 = vmin.f32 %v255, 1.0
        %v262 = vmin.f32 %v256, 1.0
        %v263 = vmin.f32 %v257, 1.0
        %v264 = vmin.f32 %v258, 1.0
        %v265 = vmin.f32 %v259, 1.0
        %v266 = vmin.f32 %v260, 1.0
        %v267 = vld [vmem:[%s211] sm:$0xff]
        %v268 = vld [vmem:[%s211 + $0x8] sm:$0xff]
        %v269 = vld [vmem:[%s211 + $0x10] sm:$0xff]
        %v270 = vld [vmem:[%s211 + $0x18] sm:$0xff]
        %v271 = vld [vmem:[%s211 + $0x20] sm:$0xff]
        %v272 = vld [vmem:[%s211 + $0x28] sm:$0xff]
        %v273 = vadd.f32 %v267, %v269
        %v274 = vadd.f32 %v273, %v271
        %v275 = vadd.f32 %v268, %v270
        %v276 = vadd.f32 %v275, %v272
        %vm277 = vcmp.eq.f32.partialorder %v267, 1.0
        %vm278 = vcmp.eq.f32.partialorder %v268, 1.0
        %vm279 = vcmp.eq.f32.partialorder %v269, 1.0
        %vm280 = vcmp.eq.f32.partialorder %v270, 1.0
        %vm281 = vcmp.eq.f32.partialorder %v271, 1.0
        %vm282 = vcmp.eq.f32.partialorder %v272, 1.0
        %v283 = vsub.f32 1.0, %v261
        %v284 = vsub.f32 1.0, %v262
        %v285 = vsub.f32 1.0, %v263
        %v286 = vsub.f32 1.0, %v264
        %v287 = vsub.f32 1.0, %v265
        %v288 = vsub.f32 1.0, %v266
        %v289 = vsel %vm277, %v261, %v283
        %v290 = vsel %vm278, %v262, %v284
        %v291 = vsel %vm279, %v263, %v285
        %v292 = vsel %vm280, %v264, %v286
        %v293 = vsel %vm281, %v265, %v287
        %v294 = vsel %vm282, %v266, %v288
        %v295 = vlog2.pop %v289
        %v296 = vmul.f32 %v295, 0.6931472
        %v297 = vlog2.pop %v290
        %v298 = vmul.f32 %v297, 0.6931472
        %v299 = vlog2.pop %v291
        %v300 = vmul.f32 %v299, 0.6931472
        %v301 = vlog2.pop %v292
        %v302 = vmul.f32 %v301, 0.6931472
        %v303 = vlog2.pop %v293
        %v304 = vmul.f32 %v303, 0.6931472
        %v305 = vlog2.pop %v294
        %v306 = vmul.f32 %v305, 0.6931472
        %v307 = vsub.f32 1.0, %v267
        %v308 = vsub.f32 1.0, %v268
        %v309 = vsub.f32 1.0, %v269
        %v310 = vsub.f32 1.0, %v270
        %v311 = vsub.f32 1.0, %v271
        %v312 = vsub.f32 1.0, %v272
        %v313 = vmul.f32 %v307, %v307
        %v314 = vmul.f32 %v308, %v308
        %v315 = vmul.f32 %v309, %v309
        %v316 = vmul.f32 %v310, %v310
        %v317 = vmul.f32 %v311, %v311
        %v318 = vmul.f32 %v312, %v312
        %v319 = vmul.f32 %v313, %v313
        %v320 = vmul.f32 %v314, %v314
        %v321 = vmul.f32 %v315, %v315
        %v322 = vmul.f32 %v316, %v316
        %v323 = vmul.f32 %v317, %v317
        %v324 = vmul.f32 %v318, %v318
        %vm325 = vcmp.eq.f32.partialorder %v267, 0.0
        %vm326 = vcmp.eq.f32.partialorder %v268, 0.0
        %vm327 = vcmp.eq.f32.partialorder %v269, 0.0
        %vm328 = vcmp.eq.f32.partialorder %v270, 0.0
        %vm329 = vcmp.eq.f32.partialorder %v271, 0.0
        %vm330 = vcmp.eq.f32.partialorder %v272, 0.0
        %vm331 = vcmp.gt.f32.partialorder %v274, 0.0
        %vm332 = vcmp.gt.f32.partialorder %v276, 0.0
        %v333 = vsel %vm331, 1, 0
        %v334 = vsel %vm332, 1, 0
        %vm335 = vcmp.eq.s32.totalorder %v333, 1
        %vm336 = vcmp.eq.s32.totalorder %v334, 1
        %vm337 = vmand %vm325, %vm335
        %vm338 = vmand %vm326, %vm336
        %vm339 = vmand %vm327, %vm335
        %vm340 = vmand %vm328, %vm336
        %vm341 = vmand %vm329, %vm335
        %vm342 = vmand %vm330, %vm336
        %v343 = vsel %vm337, 4.0, %v319
        %v344 = vsel %vm338, 4.0, %v320
        %v345 = vsel %vm339, 4.0, %v321
        %v346 = vsel %vm340, 4.0, %v322
        %v347 = vsel %vm341, 4.0, %v323
        %v348 = vsel %vm342, 4.0, %v324
        %v349 = vmul.f32 %v283, %v283
        %v350 = vmul.f32 %v284, %v284
        %v351 = vmul.f32 %v285, %v285
        %v352 = vmul.f32 %v286, %v286
        %v353 = vmul.f32 %v287, %v287
        %v354 = vmul.f32 %v288, %v288
        %v355 = vmul.f32 %v261, %v261
        %v356 = vmul.f32 %v262, %v262
        %v357 = vmul.f32 %v263, %v263
        %v358 = vmul.f32 %v264, %v264
        %v359 = vmul.f32 %v265, %v265
        %v360 = vmul.f32 %v266, %v266
        %v361 = vmul.f32 %v355, %v343
        %v362 = vmul.f32 %v356, %v344
        %v363 = vmul.f32 %v357, %v345
        %v364 = vmul.f32 %v358, %v346
        %v365 = vmul.f32 %v359, %v347
        %v366 = vmul.f32 %v360, %v348
        %v367 = vsel %vm277, %v349, %v361
        %v368 = vsel %vm278, %v350, %v362
        %v369 = vsel %vm279, %v351, %v363
        %v370 = vsel %vm280, %v352, %v364
        %v371 = vsel %vm281, %v353, %v365
        %v372 = vsel %vm282, %v354, %v366
        %v373 = vmul.f32 %v296, %v367
        %v374 = vmul.f32 %v298, %v368
        %v375 = vmul.f32 %v300, %v369
        %v376 = vmul.f32 %v302, %v370
        %v377 = vmul.f32 %v304, %v371
        %v378 = vmul.f32 %v306, %v372
        %v379 = vsel %vm277, %v373, 0.0
        %v380 = vsel %vm278, %v374, 0.0
        %v381 = vsel %vm279, %v375, 0.0
        %v382 = vsel %vm280, %v376, 0.0
        %v383 = vsel %vm281, %v377, 0.0
        %v384 = vsel %vm282, %v378, 0.0
        %v385 = vsel %vm277, 0.0, %v373
        %v386 = vsel %vm278, 0.0, %v374
        %v387 = vsel %vm279, 0.0, %v375
        %v388 = vsel %vm280, 0.0, %v376
        %v389 = vsel %vm281, 0.0, %v377
        %v390 = vsel %vm282, 0.0, %v378
        %v391 = vsel %vm277, 1, 0
        %v392 = vsel %vm278, 1, 0
        %v393 = vsel %vm279, 1, 0
        %v394 = vsel %vm280, 1, 0
        %v395 = vsel %vm281, 1, 0
        %v396 = vsel %vm282, 1, 0
        %v397 = vcvt.s32.f32 %v391
        %v398 = vcvt.s32.f32 %v392
        %v399 = vcvt.s32.f32 %v393
        %v400 = vcvt.s32.f32 %v394
        %v401 = vcvt.s32.f32 %v395
        %v402 = vcvt.s32.f32 %v396
        %v403 = vld [vmem:[#allocation2] sm:$0xff]
        %v404 = vadd.f32 %v379, %v380
        %v405 = vadd.f32 %v404, %v381
        %v406 = vadd.f32 %v405, %v382
        %v407 = vadd.f32 %v406, %v383
        %v408 = vadd.f32 %v407, %v384
        %v409 = vadd.f32 %v403, %v408
        %410 = vst [vmem:[#allocation2] sm:$0xff] %v409
        %s411 = scalar_lea.vmem [#allocation2], 8
        %v412 = vld [vmem:[%s411] sm:$0xff]
        %v413 = vadd.f32 %v385, %v386
        %v414 = vadd.f32 %v413, %v387
        %v415 = vadd.f32 %v414, %v388
        %v416 = vadd.f32 %v415, %v389
        %v417 = vadd.f32 %v416, %v390
        %v418 = vadd.f32 %v412, %v417
        %419 = vst [vmem:[%s411] sm:$0xff] %v418
        %s420 = scalar_lea.vmem [#allocation2], 16
        %v421 = vld [vmem:[%s420] sm:$0xff]
        %v422 = vadd.f32 %v397, %v398
        %v423 = vadd.f32 %v422, %v399
        %v424 = vadd.f32 %v423, %v400
        %v425 = vadd.f32 %v424, %v401
        %v426 = vadd.f32 %v425, %v402
        %v427 = vadd.f32 %v421, %v426
        %428 = vst [vmem:[%s420] sm:$0xff] %v427
        // Predicated region
        $region41: #{tpu_custom_call.1} parent=27 // pred_check
          %p429 = pneg %p242
        $region42: #{tpu_custom_call.1} parent=27 // pred_check_branch
          %431 = sbr.rel (%p429) target = $region44
        $region43: #{tpu_custom_call.1} parent=27 // pred_region
          %v432 = vld [vmem:[#allocation2] sm:$0xff]
          %v433 = vld [vmem:[#allocation2 + $0x8] sm:$0xff]
          %v434 = vld [vmem:[#allocation2 + $0x10] sm:$0xff]
          %435 = vst [vmem:[%s236] sm:$0xff] %v432
          %436 = vst [vmem:[%s236 + $0x8] sm:$0xff] %v433
          %437 = vst [vmem:[%s236 + $0x10] sm:$0xff] %v434
        $region44: #{tpu_custom_call.1} parent=27 // pred_fallthru
          _
        %s438 = sand.u32 %s111, 1
        %s439 = scalar_lea.sflag [#allocation5], %s438
        %s440 = sand.u32 %s111, 1
        %s441 = smul.addr %s440, 24
        %s442 = scalar_lea.vmem [#allocation8], %s441
        // Predicated region
        $region45: #{tpu_custom_call.1} parent=27 // pred_check
          %p443 = pneg %p121
        $region46: #{tpu_custom_call.1} parent=27 // pred_check_branch
          %445 = sbr.rel (%p443) target = $region48
        $region47: #{tpu_custom_call.1} parent=27 // pred_region
          %s446 = sadd.s32 %s27, %s28
          %s448 = ssub.s32 384, 384
          %449 = vsyncadd %s439, %s448
          %s450 = smul.addr %s446, 3
          %s451 = smul.addr %s450, 128
          %s452 = scalar_lea.hbm %s2, %s451
          %s453 = sshll.u32 %s442, 4
          %s454 = int_to_ptr.vmem [resolvable:$true] %s453
          %459 = dma.vmem_to_hbm [thread:$0]  %s454, 384, %s452, %s439, 128, 128, 8
        $region48: #{tpu_custom_call.1} parent=27 // pred_fallthru
          _
      $region28: #{tpu_custom_call.1} parent=5 // pred_fallthru
        _
      %p460 = scmp.le.s32.totalorder 2, %s17
      // Predicated region
      $region49: #{tpu_custom_call.1} parent=5 // pred_check
        %p461 = pneg %p460
      $region50: #{tpu_custom_call.1} parent=5 // pred_check_branch
        %463 = sbr.rel (%p461) target = $region52
      $region51: #{tpu_custom_call.1} parent=5 // pred_region
        %s464 = ssub.s32 %s17, 2
        // Predicated region
        $region53: #{tpu_custom_call.1} parent=51 // pred_check
          %p465 = pneg %p127
        $region54: #{tpu_custom_call.1} parent=51 // pred_check_branch
          %467 = sbr.rel (%p465) target = $region56
        $region55: #{tpu_custom_call.1} parent=51 // pred_region
          %s468 = sand.u32 %s112, 1
          %s469 = scalar_lea.sflag [#allocation5], %s468
          %s470 = sand.u32 %s112, 1
          %s471 = smul.addr %s470, 24
          %s472 = scalar_lea.vmem [#allocation8], %s471
          %473 = dma.done %s469, 384
        $region56: #{tpu_custom_call.1} parent=51 // pred_fallthru
          _
      $region52: #{tpu_custom_call.1} parent=5 // pred_fallthru
        _
    $region6: #{tpu_custom_call.1} parent=1 // loop_footer
      %s21 = sadd.s32 1, %s17
    $region7: #{tpu_custom_call.1} parent=1 // loop_footer_branch
      %16 = sbr.rel target = $region3
    $region8: #{tpu_custom_call.1} parent=1 // loop_exit
      _
    %474 = vsyncpa [#allocation4], 1
    %s475 = scalar_lea.sflag [#allocation4], 1
    %476 = vsyncpa %s475, 1
    %477 = vsyncpa [#allocation7], 1
    %s478 = scalar_lea.sflag [#allocation7], 1
    %479 = vsyncpa %s478, 1
    %480 = vsyncpa [#allocation5], 1
    %s481 = scalar_lea.sflag [#allocation5], 1
    %482 = vsyncpa %s481, 1

</llo_original>
